<compile_context>
chip_gen: v5e
topology: v5e:2x2
jax: 0.10.0
libtpu: 0.0.40
codegen_flags: <defaults>
</compile_context>

<pallas_src>
import functools

import jax
import jax.numpy as jnp
from jax.experimental import pallas as pl
from jax.experimental.pallas import tpu as pltpu


def _layernorm_kernel(x_ref, gamma_ref, beta_ref, o_ref, *, eps: float, n_feat: int):
    # x_ref: (tile_b, F) tile of the input. Per-row reduction over features.
    x = x_ref[...].astype(jnp.float32)

    mean = jnp.mean(x, axis=-1, keepdims=True)
    diff = x - mean

    # torch.std default: unbiased (divide by N-1). eps is added to the *std*.
    var = jnp.sum(diff * diff, axis=-1, keepdims=True) * jnp.float32(1.0 / (n_feat - 1))
    std = jnp.sqrt(var)

    # Per-row (tile_b, 1) reciprocal -> EUP; replaces a full-tile divide.
    # approx=False keeps the 1e-5 tolerance vs. the reference.
    inv = pl.reciprocal(std + jnp.float32(eps), approx=False)

    gamma = gamma_ref[...]  # (1, F) f32 (cast once in wrapper), block-resident
    beta = beta_ref[...]    # (1, F) f32

    y = (diff * inv) * gamma + beta
    o_ref[...] = y.astype(o_ref.dtype)


def _round_up(x: int, m: int) -> int:
    return ((x + m - 1) // m) * m


def _pick_tile_b(B: int, F: int, itemsize: int, *, budget_bytes: int = 28 * 1024 * 1024) -> int:
    """Pick the row tile from a VMEM budget.

    Budget model: double-buffered input block + double-buffered output block,
    sized at the f32 working width (conservative for bf16 inputs too, since all
    compute is done in f32 vregs anyway). Keeps headroom under the 64 MiB
    vmem_limit below (and under v7x's 64 MiB physical VMEM).
    """
    bytes_per_row = 4 * F * 4  # (2 in-bufs + 2 out-bufs) * F * 4B
    tile = budget_bytes // max(bytes_per_row, 1)
    tile = max(8, min(tile, 1024))
    tile = (tile // 8) * 8
    # For sub-32-bit inputs (bf16 sublane packing on v5e) prefer a multiple of 16.
    if itemsize < 4 and tile >= 16:
        tile = (tile // 16) * 16
    # Don't exceed the (sublane-rounded) batch.
    tile = min(tile, _round_up(B, 8))
    # Keep at least 2 grid steps when the batch allows it, so the "parallel"
    # batch axis can be split across v7x's 2 TensorCores.
    if B >= 16:
        tile = min(tile, _round_up(pl.cdiv(B, 2), 8))
    return max(tile, 8)


def layer_norm(x: jax.Array, gamma: jax.Array, beta: jax.Array, eps: float = 1e-6,
               *, tile_b: int | None = None) -> jax.Array:
    """LayerNorm over the last axis of a 2-D input [batch, features]."""
    B, F = x.shape
    assert F > 1, "unbiased std requires at least 2 features (divides by N-1)"

    # Cast parameters once here; inside the kernel they are read as-is every
    # grid step (block-resident, constant index_map) with no per-step casts.
    gamma2d = gamma.astype(jnp.float32).reshape(1, F)
    beta2d = beta.astype(jnp.float32).reshape(1, F)

    if tile_b is None:
        tile_b = _pick_tile_b(B, F, jnp.dtype(x.dtype).itemsize)

    grid = (pl.cdiv(B, tile_b),)
    kernel = functools.partial(_layernorm_kernel, eps=eps, n_feat=F)

    # NOTE: if F is not a multiple of 128, stores are lane-masked (vst.msk).
    # Padding F here would corrupt the per-row mean/std without masked
    # reductions, so we keep F as-is for correctness.
    # TODO(synk): masked-reduction path with F padded to a multiple of 128 for
    # lane-dense stores on small-F shapes.
    return pl.pallas_call(
        kernel,
        out_shape=jax.ShapeDtypeStruct((B, F), x.dtype),
        grid_spec=pltpu.PrefetchScalarGridSpec(
            num_scalar_prefetch=0,
            grid=grid,
            in_specs=[
                pl.BlockSpec((tile_b, F), lambda i: (i, 0)),
                pl.BlockSpec((1, F), lambda i: (0, 0)),
                pl.BlockSpec((1, F), lambda i: (0, 0)),
            ],
            out_specs=pl.BlockSpec((tile_b, F), lambda i: (i, 0)),
        ),
        compiler_params=pltpu.CompilerParams(
            dimension_semantics=("parallel",),
            # Raise scoped VMEM past v5e's 16 MiB default; stays within v7x's
            # 64 MiB physical VMEM. Actual use is <= ~28 MiB of tile buffers.
            vmem_limit_bytes=64 * 1024 * 1024,
        ),
    )(x, gamma2d, beta2d)


def layer_norm_ref(x, gamma, beta, eps=1e-6):
    """Pure-JAX reference matching the PyTorch module semantics."""
    x32 = x.astype(jnp.float32)
    mean = jnp.mean(x32, axis=-1, keepdims=True)
    var = jnp.sum((x32 - mean) ** 2, axis=-1, keepdims=True) / (x.shape[-1] - 1)
    std = jnp.sqrt(var)
    return (gamma.astype(jnp.float32) * (x32 - mean) / (std + eps)
            + beta.astype(jnp.float32)).astype(x.dtype)


if __name__ == "__main__":
    key = jax.random.PRNGKey(0)

    # Small shape consistent with the module (batch=8, hidden=32), matching the
    # deterministic parameter init: fixedStd = ones, fixedMean = zeros.
    batch, features = 8, 32
    x = jax.random.normal(key, (batch, features), dtype=jnp.float32)
    gamma = jnp.ones((features,), dtype=jnp.float32)
    beta = jnp.zeros((features,), dtype=jnp.float32)

    out = layer_norm(x, gamma, beta, eps=1e-6)
    jax.block_until_ready(out)
    ref = layer_norm_ref(x, gamma, beta, eps=1e-6)
    assert out.shape == x.shape and out.dtype == x.dtype
    assert jnp.allclose(out, ref, atol=1e-5, rtol=1e-5), "mismatch vs reference (small)"

    # Second, slightly larger shape to exercise the multi-step tiled path
    # (lane-dense F=256, grid split across >= 2 steps).
    k2 = jax.random.PRNGKey(1)
    x2 = jax.random.normal(k2, (64, 256), dtype=jnp.float32) * 3.0 + 0.5
    g2 = jax.random.normal(jax.random.PRNGKey(2), (256,), dtype=jnp.float32)
    b2 = jax.random.normal(jax.random.PRNGKey(3), (256,), dtype=jnp.float32)
    out2 = layer_norm(x2, g2, b2, eps=1e-6)
    jax.block_until_ready(out2)
    ref2 = layer_norm_ref(x2, g2, b2, eps=1e-6)
    assert jnp.allclose(out2, ref2, atol=1e-5, rtol=1e-5), "mismatch vs reference (tiled)"

    print("KERNEL_OK")
</pallas_src>

<mosaic_0001>
module attributes {stable_mosaic.version = 11 : i64} {
  func.func @_layernorm_kernel(%arg0: i32, %arg1: memref<8x32xf32, #tpu.memory_space<vmem>>, %arg2: memref<1x32xf32, #tpu.memory_space<vmem>>, %arg3: memref<1x32xf32, #tpu.memory_space<vmem>>, %arg4: memref<8x32xf32, #tpu.memory_space<vmem>>) attributes {dimension_semantics = [#tpu.dimension_semantics<parallel>], iteration_bounds = array<i64: 1>, scalar_prefetch = 0 : i64, scratch_operands = 0 : i64, tpu.core_type = #tpu.core_type<tc>, window_params = [{transform_indices = @transform_0, window_bounds = array<i64: 8, 32>}, {pipeline_mode = #tpu.pipeline_mode<synchronous>, transform_indices = @transform_1, window_bounds = array<i64: 1, 32>}, {pipeline_mode = #tpu.pipeline_mode<synchronous>, transform_indices = @transform_2, window_bounds = array<i64: 1, 32>}, {transform_indices = @transform_3, window_bounds = array<i64: 8, 32>}]} {
    %c0 = arith.constant 0 : index
    %c0_0 = arith.constant 0 : index
    %0 = vector.load %arg1[%c0, %c0_0] : memref<8x32xf32, #tpu.memory_space<vmem>>, vector<8x32xf32>
    %cst = arith.constant dense<0.000000e+00> : vector<8xf32>
    %1 = vector.multi_reduction <add>, %0, %cst [1] : vector<8x32xf32> to vector<8xf32>
    %2 = vector.shape_cast %1 : vector<8xf32> to vector<8x1xf32>
    %cst_1 = arith.constant 3.200000e+01 : f32
    %3 = vector.broadcast %cst_1 : f32 to vector<8x1xf32>
    %4 = arith.divf %2, %3 : vector<8x1xf32>
    %5 = vector.broadcast %4 : vector<8x1xf32> to vector<8x32xf32>
    %6 = arith.subf %0, %5 : vector<8x32xf32>
    %7 = arith.mulf %6, %6 : vector<8x32xf32>
    %cst_2 = arith.constant dense<0.000000e+00> : vector<8xf32>
    %8 = vector.multi_reduction <add>, %7, %cst_2 [1] : vector<8x32xf32> to vector<8xf32>
    %9 = vector.shape_cast %8 : vector<8xf32> to vector<8x1xf32>
    %cst_3 = arith.constant 0.0322580636 : f32
    %10 = vector.broadcast %cst_3 : f32 to vector<8x1xf32>
    %11 = arith.mulf %9, %10 : vector<8x1xf32>
    %12 = math.sqrt %11 : vector<8x1xf32>
    %cst_4 = arith.constant 9.99999997E-7 : f32
    %13 = vector.broadcast %cst_4 : f32 to vector<8x1xf32>
    %14 = arith.addf %12, %13 : vector<8x1xf32>
    %15 = tpu.reciprocal %14 : vector<8x1xf32> -> vector<8x1xf32>
    %c0_5 = arith.constant 0 : index
    %c0_6 = arith.constant 0 : index
    %16 = vector.load %arg2[%c0_5, %c0_6] : memref<1x32xf32, #tpu.memory_space<vmem>>, vector<1x32xf32>
    %c0_7 = arith.constant 0 : index
    %c0_8 = arith.constant 0 : index
    %17 = vector.load %arg3[%c0_7, %c0_8] : memref<1x32xf32, #tpu.memory_space<vmem>>, vector<1x32xf32>
    %18 = vector.broadcast %15 : vector<8x1xf32> to vector<8x32xf32>
    %19 = arith.mulf %6, %18 : vector<8x32xf32>
    %20 = vector.broadcast %16 : vector<1x32xf32> to vector<8x32xf32>
    %21 = arith.mulf %19, %20 : vector<8x32xf32>
    %22 = vector.broadcast %17 : vector<1x32xf32> to vector<8x32xf32>
    %23 = arith.addf %21, %22 : vector<8x32xf32>
    %c0_9 = arith.constant 0 : index
    %c0_10 = arith.constant 0 : index
    %24 = vector.load %arg4[%c0_9, %c0_10] : memref<8x32xf32, #tpu.memory_space<vmem>>, vector<8x32xf32>
    tpu.vector_store %arg4[%c0_9, %c0_10], %23 {strides = array<i32>} : memref<8x32xf32, #tpu.memory_space<vmem>>, vector<8x32xf32>,
    return
  }
  func.func @transform_0(%arg0: i32) -> (i32, i32) {
    %c0_i32 = arith.constant 0 : i32
    %c0_i32_0 = arith.constant 0 : i32
    return %arg0, %c0_i32 : i32, i32
  }
  func.func @transform_1(%arg0: i32) -> (i32, i32) {
    %c0_i32 = arith.constant 0 : i32
    %c0_i32_0 = arith.constant 0 : i32
    %c0_i32_1 = arith.constant 0 : i32
    return %c0_i32, %c0_i32_0 : i32, i32
  }
  func.func @transform_2(%arg0: i32) -> (i32, i32) {
    %c0_i32 = arith.constant 0 : i32
    %c0_i32_0 = arith.constant 0 : i32
    %c0_i32_1 = arith.constant 0 : i32
    return %c0_i32, %c0_i32_0 : i32, i32
  }
  func.func @transform_3(%arg0: i32) -> (i32, i32) {
    %c0_i32 = arith.constant 0 : i32
    %c0_i32_0 = arith.constant 0 : i32
    return %arg0, %c0_i32 : i32, i32
  }
}

</mosaic_0001>

<llo_original>
// kernel: tpu_custom_call.1
$region0: #{tpu_custom_call.1}
  #allocation0 [shape = 'u32[]', space=smem, size = 0x4, offset = 0x4, fixed_abs, tag = 'smem constant byte address 0x4 - core index']
  #allocation1 [shape = 'u32[72,128]{1,0:T(1,128)}', space=vmem, size = 0x9000, scoped, tag = 'internal scratch']
  %s0 = inlined_call_operand.hbm [shape: f32[8,32], index: 0, kind: input, shape index: {}]
  %s1 = inlined_call_operand.hbm [shape: f32[1,32], index: 1, kind: input, shape index: {}]
  %s2 = inlined_call_operand.vmem [shape: f32[1,32], index: 2, kind: input, shape index: {}]
  %s3 = inlined_call_operand.hbm [shape: f32[8,32], index: 3, kind: output, shape index: {}]
  %s4 = sld [smem:[#allocation0]]
  $region30: #{tpu_custom_call.1} parent=0
    _
  %s6 = ssub.s32 1, %s4
  %s7 = scalar_select 0, %s6, %s4
  $region1: #{tpu_custom_call.1} parent=0
    #allocation2 [shape = 'u8[4096]{0}', space=vmem, size = 0x1000, scoped, tag = 'input window, operand 0, single buffered']
    #allocation3 [shape = 's32[1]{0}', space=sflag, size = 0x4, scoped, tag = 'scoped memory for tpu_custom_call.1']
    #allocation4 [shape = 's32[1]{0}', space=sflag, size = 0x4, scoped, tag = 'scoped memory for tpu_custom_call.1']
    #allocation5 [shape = 'u8[512]{0}', space=vmem, size = 0x400, scoped, tag = 'input window, operand 1, single buffered']
    #allocation6 [shape = 's32[1]{0}', space=sflag, size = 0x4, scoped, tag = 'scoped memory for tpu_custom_call.1']
    #allocation7 [shape = 'u8[4096]{0}', space=vmem, size = 0x1000, scoped, tag = 'output window, operand 0, single buffered']
    %8 = vsyncpa [#allocation3], 0
    %9 = vsyncpa [#allocation6], 0
    %10 = vsyncpa [#allocation4], 0
    // Predicated region
    $region2: #{tpu_custom_call.1} parent=1 // pred_check
      _
    $region3: #{tpu_custom_call.1} parent=1 // pred_check_branch
      %12 = sbr.rel (0) target = $region5
    $region4: #{tpu_custom_call.1} parent=1 // pred_region
      %14 = vsyncadd [#allocation3], 0
      %s16 = sshll.u32 %s0, 4
      %s17 = int_to_ptr.hbm [resolvable:$true] %s16
      %s18 = sshll.u32 [#allocation2], 4
      %s19 = int_to_ptr.vmem [resolvable:$true] %s18
      %21 = dma.hbm_to_vmem [thread:$0]  %s17, 128, %s19, [#allocation3]
    $region5: #{tpu_custom_call.1} parent=1 // pred_fallthru
      _
    // Predicated region
    $region6: #{tpu_custom_call.1} parent=1 // pred_check
      _
    $region7: #{tpu_custom_call.1} parent=1 // pred_check_branch
      %23 = sbr.rel (0) target = $region9
    $region8: #{tpu_custom_call.1} parent=1 // pred_region
      %25 = vsyncadd [#allocation6], 0
      %s27 = sshll.u32 %s1, 4
      %s28 = int_to_ptr.hbm [resolvable:$true] %s27
      %s29 = sshll.u32 [#allocation5], 4
      %s30 = int_to_ptr.vmem [resolvable:$true] %s29
      %32 = dma.hbm_to_vmem [thread:$0]  %s28, 16, %s30, [#allocation6]
    $region9: #{tpu_custom_call.1} parent=1 // pred_fallthru
      _
    // Predicated region
    $region10: #{tpu_custom_call.1} parent=1 // pred_check
      _
    $region11: #{tpu_custom_call.1} parent=1 // pred_check_branch
      %34 = sbr.rel (0) target = $region13
    $region12: #{tpu_custom_call.1} parent=1 // pred_region
      _
    $region13: #{tpu_custom_call.1} parent=1 // pred_fallthru
      _
    // Predicated region
    $region14: #{tpu_custom_call.1} parent=1 // pred_check
      _
    $region15: #{tpu_custom_call.1} parent=1 // pred_check_branch
      %36 = sbr.rel (0) target = $region17
    $region16: #{tpu_custom_call.1} parent=1 // pred_region
      %38 = dma.done [#allocation3], 128
    $region17: #{tpu_custom_call.1} parent=1 // pred_fallthru
      _
    // Predicated region
    $region18: #{tpu_custom_call.1} parent=1 // pred_check
      _
    $region19: #{tpu_custom_call.1} parent=1 // pred_check_branch
      %40 = sbr.rel (0) target = $region21
    $region20: #{tpu_custom_call.1} parent=1 // pred_region
      %42 = dma.done [#allocation6], 16
    $region21: #{tpu_custom_call.1} parent=1 // pred_fallthru
      _
    %v43 = vld [vmem:[#allocation2] sm:$0xff]
    %vm44 = vcmask 261120
    %v45 = vsel %vm44, %v43, 0.0
    %46 = vadd.xlane.f32.xlu0 %v45
    %v47 = vpop.xlane.xlu0 %46
    %v48 = vrcp.pop 32.0
    %v49 = vmul.f32 32.0, %v48
    %v50 = vsub.f32 1.0, %v49
    %v51 = vmul.f32 %v48, %v50
    %v52 = vadd.f32 %v48, %v51
    %vm53 = vweird.f32 %v48
    %v54 = vsel %vm53, %v48, %v52
    %v55 = vmul.f32 %v47, %v54
    %v56 = vsub.f32 %v43, %v55
    %v57 = vmul.f32 %v56, %v56
    %v58 = vsel %vm44, %v57, 0.0
    %59 = vadd.xlane.f32.xlu0 %v58
    %v60 = vpop.xlane.xlu0 %59
    %v61 = vmul.f32 %v60, 0.032258064
    %v62 = vrsqrt.pop %v61
    %v63 = vmul.f32 %v62, %v61
    %v64 = vmul.f32 %v63, %v62
    %v65 = vmul.f32 0.5, %v64
    %v66 = vsub.f32 1.5, %v65
    %v67 = vmul.f32 %v62, %v66
    %v68 = vmul.f32 %v61, %v67
    %vm69 = vcmp.eq.f32.partialorder %v61, inf
    %v70 = vsel %vm69, %v61, %v68
    %vm71 = vcmp.eq.f32.partialorder %v61, 0.0
    %v72 = vand.u32 %v61, 2147483648
    %v73 = vsel %vm71, %v72, %v70
    %v74 = vadd.f32 %v73, 1e-06
    %v75 = vrcp.pop %v74
    %v76 = vmul.f32 %v74, %v75
    %v77 = vsub.f32 1.0, %v76
    %v78 = vmul.f32 %v75, %v77
    %v79 = vadd.f32 %v75, %v78
    %vm80 = vweird.f32 %v74
    %vm81 = vweird.f32 %v75
    %vm82 = vmor %vm80, %vm81
    %v83 = vsel %vm82, %v75, %v79
    %v84 = vand.u32 2147483647, %v74
    %vm85 = vcmp.eq.f32.partialorder %v84, 8.507059e+37
    %v86 = vand.u32 %v74, 2147483648
    %v87 = vor.u32 1.1754944e-38, %v86
    %v88 = vsel %vm85, %v87, %v83
    %v89 = vld [vmem:[#allocation5] sm:$0x1]
    %v90 = vld [vmem:[%s2] sm:$0x1]
    %v91 = vmul.f32 %v56, %v88
    %v93 = vperm.slane %v89, 0
    %v95 = vmul.f32 %v91, %v93
    %v97 = vperm.slane %v90, 0
    %v99 = vadd.f32 %v95, %v97
    %100 = vst.msk [vmem:[#allocation7] sm:$0xff] %vm44, %v99
    // Predicated region
    $region22: #{tpu_custom_call.1} parent=1 // pred_check
      _
    $region23: #{tpu_custom_call.1} parent=1 // pred_check_branch
      %102 = sbr.rel (0) target = $region25
    $region24: #{tpu_custom_call.1} parent=1 // pred_region
      %104 = vsyncadd [#allocation4], 0
      %s106 = sshll.u32 [#allocation7], 4
      %s107 = int_to_ptr.vmem [resolvable:$true] %s106
      %s108 = sshll.u32 %s3, 4
      %s109 = int_to_ptr.hbm [resolvable:$true] %s108
      %111 = dma.vmem_to_hbm [thread:$0]  %s107, 128, %s109, [#allocation4]
    $region25: #{tpu_custom_call.1} parent=1 // pred_fallthru
      _
    // Predicated region
    $region26: #{tpu_custom_call.1} parent=1 // pred_check
      _
    $region27: #{tpu_custom_call.1} parent=1 // pred_check_branch
      %113 = sbr.rel (0) target = $region29
    $region28: #{tpu_custom_call.1} parent=1 // pred_region
      %115 = dma.done [#allocation4], 128
    $region29: #{tpu_custom_call.1} parent=1 // pred_fallthru
      _
    %116 = vsyncpa [#allocation3], 1
    %117 = vsyncpa [#allocation6], 1
    %118 = vsyncpa [#allocation4], 1

</llo_original>
